<compile_context>
chip_gen: v7x
topology: tpu7x:2x2x1
jax: 0.10.0
libtpu: 0.0.40
codegen_flags: <defaults>
</compile_context>

<pallas_src>
import jax
import jax.numpy as jnp
from jax.experimental import pallas as pl
from jax.experimental.pallas import tpu as pltpu


def _chomp_copy_kernel(x_ref, o_ref):
    # Both blocks are (TR, TL); only the kept time window is ever DMA'd in and
    # Pallas masks the writeback of ragged edge blocks, so a straight
    # full-tile copy is correct (stale padding lanes are never stored).
    o_ref[...] = x_ref[...]


def chomp1d(x: jax.Array, chomp_size: int) -> jax.Array:
    """Pallas implementation of Chomp1d.forward (x[:, :, :-chomp_size]).

    Note: chomp_size == 0 is rejected; PyTorch's x[..., :-0] is empty, which
    is almost certainly a caller bug.
    """
    assert chomp_size > 0, "chomp_size must be positive"
    n, c, l = x.shape
    l_out = l - chomp_size
    assert l_out > 0, "chomp_size must be smaller than the sequence length"

    # Tiny kept windows (< 128 lanes): masked partial stores + per-step
    # overhead make a Pallas copy a loss — let XLA do the slice.
    if l_out < 128:
        return x[:, :, :l_out]

    rows = n * c
    x2 = x.reshape(rows, l)  # metadata-only reshape of a contiguous array

    elem_bytes = x.dtype.itemsize
    sublane = max(8, 32 // elem_bytes)              # 8 f32 / 16 bf16 / 32 i8
    lane_cap = ((4096 // elem_bytes) // 128) * 128  # 1024 / 2048 / 4096 lanes

    # Row tile: full rows if they fit, else 512 rows (multiple of every
    # dtype's sublane packing).  <= ~2 MiB per buffer at the caps.
    tr = rows if rows <= 512 else 512

    # Balanced, lane-dense time tiles: never a sub-128-lane sliver edge tile.
    n_chunks = pl.cdiv(l_out, 128)
    n_ttiles = pl.cdiv(l_out, lane_cap)
    tl = 128 * pl.cdiv(n_chunks, n_ttiles)

    grid_r = pl.cdiv(rows, tr)
    grid_t = pl.cdiv(l_out, tl)

    # v7x has 2 TensorCores per chip: a (1, 1) grid leaves one idle and kills
    # DMA pipelining.  Split rows (preferred) or time to get >= 2 steps.
    if grid_r * grid_t < 2:
        if rows >= 2 * sublane:
            tr = sublane * pl.cdiv(pl.cdiv(rows, sublane), 2)
            grid_r = pl.cdiv(rows, tr)
        elif n_chunks >= 2:
            tl = 128 * pl.cdiv(n_chunks, 2)
            grid_t = pl.cdiv(l_out, tl)

    y2 = pl.pallas_call(
        _chomp_copy_kernel,
        out_shape=jax.ShapeDtypeStruct((rows, l_out), x.dtype),
        grid_spec=pltpu.PrefetchScalarGridSpec(
            num_scalar_prefetch=0,
            grid=(grid_r, grid_t),
            in_specs=[pl.BlockSpec((tr, tl), lambda r, t: (r, t))],
            out_specs=pl.BlockSpec((tr, tl), lambda r, t: (r, t)),
        ),
        compiler_params=pltpu.CompilerParams(
            dimension_semantics=("parallel", "parallel"),
        ),
    )(x2)

    return y2.reshape(n, c, l_out)


def _check(x, chomp_size):
    y = jax.block_until_ready(chomp1d(x, chomp_size))
    y_ref = x[:, :, :-chomp_size]
    assert y.shape == y_ref.shape, (y.shape, y_ref.shape)
    assert y.dtype == x.dtype
    assert jnp.array_equal(y, y_ref), "Pallas chomp1d mismatch vs reference slice"


if __name__ == "__main__":
    key = jax.random.PRNGKey(0)
    k1, k2, k3, k4 = jax.random.split(key, 4)

    # 1) TCN-like shape, exact 128-lane kept window (forced 2-step row grid).
    x1 = jax.random.normal(k1, (2, 8, 136), dtype=jnp.float32)
    _check(x1, 8)

    # 2) Ragged kept window (masked edge writeback) on the Pallas fast path.
    x2 = jax.random.normal(k2, (2, 8, 200), dtype=jnp.float32)
    _check(x2, 5)

    # 3) bf16: dtype-aware lane cap / sublane multiple, multi-step grid.
    x3 = jax.random.normal(k3, (3, 64, 1408), dtype=jnp.bfloat16)
    _check(x3, 50)

    # 4) Short sequence (< 128 kept lanes) -> plain XLA slice path.
    x4 = jax.random.normal(k4, (2, 4, 20), dtype=jnp.float32)
    _check(x4, 3)

    print("KERNEL_OK")
</pallas_src>

<mosaic_0001>
module attributes {stable_mosaic.version = 11 : i64} {
  func.func @_chomp_copy_kernel(%arg0: i32, %arg1: i32, %arg2: memref<8x128xf32, #tpu.memory_space<vmem>>, %arg3: memref<8x128xf32, #tpu.memory_space<vmem>>) attributes {dimension_semantics = [#tpu.dimension_semantics<parallel>, #tpu.dimension_semantics<parallel>], iteration_bounds = array<i64: 2, 1>, scalar_prefetch = 0 : i64, scratch_operands = 0 : i64, tpu.core_type = #tpu.core_type<tc>, window_params = [{transform_indices = @transform_0, window_bounds = array<i64: 8, 128>}, {transform_indices = @transform_1, window_bounds = array<i64: 8, 128>}]} {
    %c0 = arith.constant 0 : index
    %c0_0 = arith.constant 0 : index
    %0 = vector.load %arg2[%c0, %c0_0] : memref<8x128xf32, #tpu.memory_space<vmem>>, vector<8x128xf32>
    %c0_1 = arith.constant 0 : index
    %c0_2 = arith.constant 0 : index
    %1 = vector.load %arg3[%c0_1, %c0_2] : memref<8x128xf32, #tpu.memory_space<vmem>>, vector<8x128xf32>
    tpu.vector_store %arg3[%c0_1, %c0_2], %0 {strides = array<i32>} : memref<8x128xf32, #tpu.memory_space<vmem>>, vector<8x128xf32>,
    return
  }
  func.func @transform_0(%arg0: i32, %arg1: i32) -> (i32, i32) {
    %c0_i32 = arith.constant 0 : i32
    return %arg0, %arg1 : i32, i32
  }
  func.func @transform_1(%arg0: i32, %arg1: i32) -> (i32, i32) {
    %c0_i32 = arith.constant 0 : i32
    return %arg0, %arg1 : i32, i32
  }
}

</mosaic_0001>

<llo_original>
// kernel: tpu_custom_call.1
$region0: #{tpu_custom_call.1}
  #allocation0 [shape = 'u32[]', space=smem, size = 0x4, offset = 0x4, fixed_abs, tag = 'smem constant byte address 0x4 - core index']
  #allocation1 [shape = 'u32[144,128]{1,0:T(1,128)}', space=vmem, size = 0x12000, scoped, tag = 'internal scratch']
  %s0 = inlined_call_operand.hbm [shape: f32[16,136], index: 0, kind: input, shape index: {}]
  %s1 = inlined_call_operand.hbm [shape: f32[16,128], index: 1, kind: output, shape index: {}]
  %s2 = sld [smem:[#allocation0]]
  $region41: #{tpu_custom_call.1} parent=0
    _
  %s4 = ssub.s32 1, %s2
  %s5 = scalar_select 0, %s4, %s2
  $region1: #{tpu_custom_call.1} parent=0
    #allocation2 [shape = 'u8[8192]{0}', space=vmem, size = 0x2000, scoped, tag = 'input window, operand 0']
    #allocation3 [shape = 's32[2]{0}', space=sflag, size = 0x8, scoped, tag = 'scoped memory for tpu_custom_call.1']
    #allocation4 [shape = 's32[2]{0}', space=sflag, size = 0x8, scoped, tag = 'scoped memory for tpu_custom_call.1']
    #allocation5 [shape = 'u8[8192]{0}', space=vmem, size = 0x2000, scoped, tag = 'output window, operand 0']
    %6 = vsyncpa [#allocation3], 0
    %s7 = scalar_lea.sflag [#allocation3], 1
    %8 = vsyncpa %s7, 0
    %9 = vsyncpa [#allocation4], 0
    %s10 = scalar_lea.sflag [#allocation4], 1
    %11 = vsyncpa %s10, 0
    loop: start=0, step=1, limit=4
    $region2: #{tpu_custom_call.1} parent=1 // loop_pre_header
      _
    $region3: #{tpu_custom_call.1} parent=1 // loop_header
      %s13 = sphi 0, %s17
      %p14 = scmp.ge.s32.totalorder %s13, 4
      %s20 = sphi 0, %s32
      %s21 = sphi 0, %s28
      %s22 = sphi 0, %s20
      %s23 = sphi 0, %s21
      %s24 = sphi 0, %s22
      %s25 = sphi 0, %s23
      %s37 = sphi 0, %s39
      %s40 = sphi 0, %s37
      %s41 = sphi 0, %s40
      %s57 = sphi 0, %s41
      %s65 = sphi 0, %s67
      %s68 = sphi 0, %s65
      %s69 = sphi 0, %s68
      %s85 = sphi 0, %s69
    $region4: #{tpu_custom_call.1} parent=1 // loop_header_branch
      %16 = sbr.rel (%p14) target = $region8
    $region5: #{tpu_custom_call.1} parent=1 // loop_body
      %s18 = ssub.s32 %s13, 1
      %s19 = ssub.s32 %s13, 2
      %s26 = sadd.s32 1, %s21
      %p27 = scmp.ge.s32.totalorder %s26, 1
      %s28 = scalar_select %p27, 0, %s26
      %s29 = sadd.s32 1, %s20
      %s30 = scalar_select %p27, %s29, %s20
      %p31 = scmp.ge.s32.totalorder %s30, 2
      %s32 = scalar_select %p31, 0, %s30
      %s33 = ssub.s32 %s20, %s32
      %s34 = ssub.s32 %s21, %s28
      %s35 = sor.u32 %s33, %s34
      %p36 = scmp.eq.s32.totalorder %s35, 0
      %s38 = sadd.s32 %s37, 1
      %s39 = scalar_select %p36, %s37, %s38
      %p42 = pneg %p36
      %p43 = scmp.eq.s32.totalorder %s13, 1
      %p44 = por %p42, %p43
      %p45 = scmp.ne.s32.totalorder %s37, %s40
      %p46 = scmp.eq.s32.totalorder %s13, 0
      %p47 = por %p45, %p46
      %p48 = scmp.ne.s32.totalorder %s37, %s40
      %p49 = scmp.eq.s32.totalorder %s18, 1
      %p50 = por %p48, %p49
      %p51 = scmp.ne.s32.totalorder %s40, %s41
      %p52 = scmp.eq.s32.totalorder %s18, 0
      %p53 = por %p51, %p52
      %p54 = scmp.ne.s32.totalorder %s40, %s41
      %p55 = scmp.eq.s32.totalorder %s19, 1
      %p56 = por %p54, %p55
      %p58 = scmp.ne.s32.totalorder %s41, %s57
      %p59 = scmp.eq.s32.totalorder %s19, 0
      %p60 = por %p58, %p59
      %s61 = ssub.s32 %s20, %s32
      %s62 = ssub.s32 %s21, %s28
      %s63 = sor.u32 %s61, %s62
      %p64 = scmp.eq.s32.totalorder %s63, 0
      %s66 = sadd.s32 %s65, 1
      %s67 = scalar_select %p64, %s65, %s66
      %p70 = pneg %p64
      %p71 = scmp.eq.s32.totalorder %s13, 1
      %p72 = por %p70, %p71
      %p73 = scmp.ne.s32.totalorder %s65, %s68
      %p74 = scmp.eq.s32.totalorder %s13, 0
      %p75 = por %p73, %p74
      %p76 = scmp.ne.s32.totalorder %s65, %s68
      %p77 = scmp.eq.s32.totalorder %s18, 1
      %p78 = por %p76, %p77
      %p79 = scmp.ne.s32.totalorder %s68, %s69
      %p80 = scmp.eq.s32.totalorder %s18, 0
      %p81 = por %p79, %p80
      %p82 = scmp.ne.s32.totalorder %s68, %s69
      %p83 = scmp.eq.s32.totalorder %s19, 1
      %p84 = por %p82, %p83
      %p86 = scmp.ne.s32.totalorder %s69, %s85
      %p87 = scmp.eq.s32.totalorder %s19, 0
      %p88 = por %p86, %p87
      %p89 = scmp.le.s32.totalorder 1, %s13
      %p90 = scmp.lt.s32.totalorder %s13, 3
      %p91 = pnand %p89, %p90
      %p92 = pneg %p91
      // Predicated region
      $region9: #{tpu_custom_call.1} parent=5 // pred_check
        _
      $region10: #{tpu_custom_call.1} parent=5 // pred_check_branch
        %94 = sbr.rel (%p91) target = $region12
      $region11: #{tpu_custom_call.1} parent=5 // pred_region
        %s95 = ssub.s32 %s13, 1
      $region12: #{tpu_custom_call.1} parent=5 // pred_fallthru
        _
      %p96 = scmp.lt.s32.totalorder %s13, 2
      // Predicated region
      $region13: #{tpu_custom_call.1} parent=5 // pred_check
        %p97 = pneg %p96
      $region14: #{tpu_custom_call.1} parent=5 // pred_check_branch
        %99 = sbr.rel (%p97) target = $region16
      $region15: #{tpu_custom_call.1} parent=5 // pred_region
        // Predicated region
        $region17: #{tpu_custom_call.1} parent=15 // pred_check
          %p100 = pneg %p47
        $region18: #{tpu_custom_call.1} parent=15 // pred_check_branch
          %102 = sbr.rel (%p100) target = $region20
        $region19: #{tpu_custom_call.1} parent=15 // pred_region
          %s103 = sand.u32 %s37, 1
          %s104 = scalar_lea.sflag [#allocation3], %s103
          %s105 = sand.u32 %s37, 1
          %s106 = smul.addr %s105, 8
          %s107 = scalar_lea.vmem [#allocation2], %s106
          %s109 = ssub.s32 128, 128
          %110 = vsyncadd %s104, %s109
          %s111 = smul.addr %s20, 2
          %s112 = sadd.s32 %s21, %s111
          %s113 = smul.addr %s112, 128
          %s114 = scalar_lea.hbm %s0, %s113
          %s116 = sshll.u32 %s107, 4
          %s117 = int_to_ptr.vmem [resolvable:$true] %s116
          %119 = dma.hbm_to_vmem [thread:$0]  %s114, 128, %s117, %s104
        $region20: #{tpu_custom_call.1} parent=15 // pred_fallthru
          _
      $region16: #{tpu_custom_call.1} parent=5 // pred_fallthru
        _
      %p120 = scmp.le.s32.totalorder 1, %s13
      %p121 = scmp.lt.s32.totalorder %s13, 3
      %p122 = pnand %p120, %p121
      %p123 = pneg %p122
      // Predicated region
      $region21: #{tpu_custom_call.1} parent=5 // pred_check
        _
      $region22: #{tpu_custom_call.1} parent=5 // pred_check_branch
        %125 = sbr.rel (%p122) target = $region24
      $region23: #{tpu_custom_call.1} parent=5 // pred_region
        %s126 = ssub.s32 %s13, 1
        %s127 = sand.u32 %s40, 1
        %s128 = scalar_lea.sflag [#allocation3], %s127
        %s129 = sand.u32 %s40, 1
        %s130 = smul.addr %s129, 8
        %s131 = scalar_lea.vmem [#allocation2], %s130
        // Predicated region
        $region25: #{tpu_custom_call.1} parent=23 // pred_check
          %p132 = pneg %p53
        $region26: #{tpu_custom_call.1} parent=23 // pred_check_branch
          %134 = sbr.rel (%p132) target = $region28
        $region27: #{tpu_custom_call.1} parent=23 // pred_region
          %135 = dma.done %s128, 128
        $region28: #{tpu_custom_call.1} parent=23 // pred_fallthru
          _
        %s136 = sand.u32 %s40, 1
        %s137 = scalar_lea.sflag [#allocation3], %s136
        %s138 = sand.u32 %s40, 1
        %s139 = smul.addr %s138, 8
        %s140 = scalar_lea.vmem [#allocation2], %s139
        %p141 = pneg %p53
        %p142 = pneg %p50
        %p143 = pneg %p81
        %p144 = pneg %p78
        %s145 = sand.u32 %s68, 1
        %s146 = scalar_lea.sflag [#allocation4], %s145
        %s147 = sand.u32 %s68, 1
        %s148 = smul.addr %s147, 8
        %s149 = scalar_lea.vmem [#allocation5], %s148
        %v150 = vld [vmem:[%s131] sm:$0xff]
        %151 = vst [vmem:[%s149] sm:$0xff] %v150
        %s152 = sand.u32 %s68, 1
        %s153 = scalar_lea.sflag [#allocation4], %s152
        %s154 = sand.u32 %s68, 1
        %s155 = smul.addr %s154, 8
        %s156 = scalar_lea.vmem [#allocation5], %s155
        // Predicated region
        $region29: #{tpu_custom_call.1} parent=23 // pred_check
          %p157 = pneg %p78
        $region30: #{tpu_custom_call.1} parent=23 // pred_check_branch
          %159 = sbr.rel (%p157) target = $region32
        $region31: #{tpu_custom_call.1} parent=23 // pred_region
          %s161 = ssub.s32 128, 128
          %162 = vsyncadd %s153, %s161
          %s163 = sadd.s32 %s23, %s22
          %s164 = smul.addr %s163, 128
          %s165 = scalar_lea.hbm %s1, %s164
          %s167 = sshll.u32 %s156, 4
          %s168 = int_to_ptr.vmem [resolvable:$true] %s167
          %170 = dma.vmem_to_hbm [thread:$0]  %s168, 128, %s165, %s153
        $region32: #{tpu_custom_call.1} parent=23 // pred_fallthru
          _
      $region24: #{tpu_custom_call.1} parent=5 // pred_fallthru
        _
      %p171 = scmp.le.s32.totalorder 2, %s13
      // Predicated region
      $region33: #{tpu_custom_call.1} parent=5 // pred_check
        %p172 = pneg %p171
      $region34: #{tpu_custom_call.1} parent=5 // pred_check_branch
        %174 = sbr.rel (%p172) target = $region36
      $region35: #{tpu_custom_call.1} parent=5 // pred_region
        %s175 = ssub.s32 %s13, 2
        // Predicated region
        $region37: #{tpu_custom_call.1} parent=35 // pred_check
          %p176 = pneg %p84
        $region38: #{tpu_custom_call.1} parent=35 // pred_check_branch
          %178 = sbr.rel (%p176) target = $region40
        $region39: #{tpu_custom_call.1} parent=35 // pred_region
          %s179 = sand.u32 %s69, 1
          %s180 = scalar_lea.sflag [#allocation4], %s179
          %s181 = sand.u32 %s69, 1
          %s182 = smul.addr %s181, 8
          %s183 = scalar_lea.vmem [#allocation5], %s182
          %184 = dma.done %s180, 128
        $region40: #{tpu_custom_call.1} parent=35 // pred_fallthru
          _
      $region36: #{tpu_custom_call.1} parent=5 // pred_fallthru
        _
    $region6: #{tpu_custom_call.1} parent=1 // loop_footer
      %s17 = sadd.s32 1, %s13
    $region7: #{tpu_custom_call.1} parent=1 // loop_footer_branch
      %12 = sbr.rel target = $region3
    $region8: #{tpu_custom_call.1} parent=1 // loop_exit
      _
    %185 = vsyncpa [#allocation3], 1
    %s186 = scalar_lea.sflag [#allocation3], 1
    %187 = vsyncpa %s186, 1
    %188 = vsyncpa [#allocation4], 1
    %s189 = scalar_lea.sflag [#allocation4], 1
    %190 = vsyncpa %s189, 1

</llo_original>
